<compile_context>
chip_gen: v7x
topology: tpu7x:2x2x1
jax: 0.10.0
libtpu: 0.0.40
codegen_flags: <defaults>
</compile_context>

<pallas_src>
import math

import jax
import jax.numpy as jnp
from jax.experimental import pallas as pl
from jax.experimental.pallas import tpu as pltpu


def _make_scale_kernel(inv: float):
    """Kernel factory: closes over the constant reciprocal scale."""

    def kernel(x_ref, o_ref):
        # astype is a no-op when in/out dtypes already match (float inputs);
        # for uint8/int inputs it performs the promote-to-float in-register.
        o_ref[...] = x_ref[...].astype(o_ref.dtype) * inv

    return kernel


def _device_tuning():
    """(target_block_bytes, vmem_limit_bytes or None) for the local TPU gen."""
    try:
        kind = jax.devices()[0].device_kind.lower()
    except Exception:  # pragma: no cover - defensive
        kind = ""
    if "v7" in kind or "7x" in kind:
        # ~3.2 TB/s HBM: bigger blocks amortize the ~0.35us/step overhead.
        # 2 bufs x (in+out) x 8 MiB = 32 MiB > 32 MiB scoped default, so raise
        # the limit while staying well under v7x's 64 MiB physical VMEM.
        return 8 * 1024 * 1024, 48 << 20
    if "v6" in kind:
        # 4 bufs x 4 MiB = 16 MiB, comfortably under the 32 MiB scoped default.
        return 4 * 1024 * 1024, None
    # v5e and anything unknown: 2 MiB is already near roofline and safe under
    # the 16 MiB scoped-VMEM default.
    return 2 * 1024 * 1024, None


def standardize(img: jax.Array, max_val: float = 255.0) -> jax.Array:
    """Elementwise img / max_val, computed as img * (1/max_val), in Pallas."""
    inv = 1.0 / float(max_val)
    in_dtype = img.dtype

    # Match torch semantics: integer (raw pixel) inputs produce float output.
    if jnp.issubdtype(in_dtype, jnp.integer) or in_dtype == jnp.bool_:
        out_dtype = jnp.float32
    else:
        out_dtype = in_dtype

    orig_shape = img.shape
    total = int(math.prod(orig_shape)) if orig_shape else 1
    if total == 0:
        return jnp.zeros(orig_shape, out_dtype)

    # --- Free 2-D view of the contiguous buffer (no pad, no tail slice). ---
    if total % 128 == 0:
        lane = 128
        for cand in (2048, 1024, 512, 256, 128):
            if total % cand == 0:
                lane = cand
                break
    else:
        lane = orig_shape[-1] if len(orig_shape) >= 1 else total
        if lane <= 0 or total % lane != 0:  # defensive
            lane = total
    rows = total // lane
    x2d = img.reshape(rows, lane)

    in_item = jnp.dtype(in_dtype).itemsize
    out_item = jnp.dtype(out_dtype).itemsize

    block_bytes, vmem_limit = _device_tuning()
    per_row_bytes = lane * max(in_item, out_item)
    tr = max(1, block_bytes // per_row_bytes)
    if tr >= rows:
        if rows >= 64:
            # Small slab: split into >=2 blocks so both v7x TensorCores stream.
            half = -(-rows // 2)
            tr = -(-half // 32) * 32
        else:
            tr = rows  # full-extent block: always legal
    else:
        tr = max(32, (tr // 32) * 32)  # sublane-safe for f32/bf16/int8

    grid = (pl.cdiv(rows, tr),)

    out2d = pl.pallas_call(
        _make_scale_kernel(inv),
        out_shape=jax.ShapeDtypeStruct((rows, lane), out_dtype),
        grid=grid,
        in_specs=[pl.BlockSpec((tr, lane), lambda i: (i, 0))],
        out_specs=pl.BlockSpec((tr, lane), lambda i: (i, 0)),
        compiler_params=pltpu.CompilerParams(
            dimension_semantics=("parallel",),
            vmem_limit_bytes=vmem_limit,
        ),
        cost_estimate=pl.CostEstimate(
            flops=total,
            transcendentals=0,
            bytes_accessed=total * (in_item + out_item),
        ),
    )(x2d)

    return out2d.reshape(orig_shape)


if __name__ == "__main__":
    key = jax.random.PRNGKey(0)

    # Small NCHW image batch, raw-pixel-like float values in [0, 255].
    x = jax.random.uniform(key, (2, 4, 16, 16), dtype=jnp.float32) * 255.0
    y = jax.block_until_ready(standardize(x, max_val=255.0))
    ref = x / 255.0
    assert y.shape == x.shape and y.dtype == x.dtype
    assert jnp.allclose(y, ref, atol=1e-6, rtol=1e-6)

    # Odd element count exercises the natural-layout (full last-dim) path.
    x2 = jax.random.uniform(jax.random.PRNGKey(1), (1, 3, 17, 19),
                            dtype=jnp.float32) * 255.0
    y2 = jax.block_until_ready(standardize(x2, max_val=255.0))
    assert jnp.allclose(y2, x2 / 255.0, atol=1e-6, rtol=1e-6)

    # uint8 raw pixels: output must be float (matches torch `img / 255.0`).
    x3 = jax.random.randint(jax.random.PRNGKey(2), (2, 3, 16, 16),
                            0, 256, dtype=jnp.int32).astype(jnp.uint8)
    y3 = jax.block_until_ready(standardize(x3, max_val=255.0))
    ref3 = x3.astype(jnp.float32) / 255.0
    assert y3.dtype == jnp.float32 and y3.shape == x3.shape
    assert jnp.allclose(y3, ref3, atol=1e-6, rtol=1e-6)

    print("KERNEL_OK")
</pallas_src>

<mosaic_0001>
module attributes {stable_mosaic.version = 11 : i64} {
  func.func @kernel(%arg0: i32, %arg1: memref<1x2048xf32, #tpu.memory_space<vmem>>, %arg2: memref<1x2048xf32, #tpu.memory_space<vmem>>) attributes {dimension_semantics = [#tpu.dimension_semantics<parallel>], iteration_bounds = array<i64: 1>, scalar_prefetch = 0 : i64, scratch_operands = 0 : i64, tpu.core_type = #tpu.core_type<tc>, window_params = [{transform_indices = @transform_0, window_bounds = array<i64: 1, 2048>}, {transform_indices = @transform_1, window_bounds = array<i64: 1, 2048>}]} {
    %c0 = arith.constant 0 : index
    %c0_0 = arith.constant 0 : index
    %0 = vector.load %arg1[%c0, %c0_0] : memref<1x2048xf32, #tpu.memory_space<vmem>>, vector<1x2048xf32>
    %cst = arith.constant 0.00392156886 : f32
    %1 = vector.broadcast %cst : f32 to vector<1x2048xf32>
    %2 = arith.mulf %0, %1 : vector<1x2048xf32>
    %c0_1 = arith.constant 0 : index
    %c0_2 = arith.constant 0 : index
    %3 = vector.load %arg2[%c0_1, %c0_2] : memref<1x2048xf32, #tpu.memory_space<vmem>>, vector<1x2048xf32>
    tpu.vector_store %arg2[%c0_1, %c0_2], %2 {strides = array<i32>} : memref<1x2048xf32, #tpu.memory_space<vmem>>, vector<1x2048xf32>,
    return
  }
  func.func @transform_0(%arg0: i32) -> (i32, i32) {
    %c0_i32 = arith.constant 0 : i32
    %c0_i32_0 = arith.constant 0 : i32
    return %arg0, %c0_i32 : i32, i32
  }
  func.func @transform_1(%arg0: i32) -> (i32, i32) {
    %c0_i32 = arith.constant 0 : i32
    %c0_i32_0 = arith.constant 0 : i32
    return %arg0, %c0_i32 : i32, i32
  }
}

</mosaic_0001>

<llo_original>
// kernel: tpu_custom_call.1
$region0: #{tpu_custom_call.1}
  #allocation0 [shape = 'u32[]', space=smem, size = 0x4, offset = 0x4, fixed_abs, tag = 'smem constant byte address 0x4 - core index']
  #allocation1 [shape = 'u32[144,128]{1,0:T(1,128)}', space=vmem, size = 0x12000, scoped, tag = 'internal scratch']
  %s0 = inlined_call_operand.hbm [shape: f32[1,2048], index: 0, kind: input, shape index: {}]
  %s1 = inlined_call_operand.hbm [shape: f32[1,2048], index: 1, kind: output, shape index: {}]
  %s2 = sld [smem:[#allocation0]]
  $region18: #{tpu_custom_call.1} parent=0
    _
  %s4 = ssub.s32 1, %s2
  %s5 = scalar_select 0, %s4, %s2
  $region1: #{tpu_custom_call.1} parent=0
    #allocation2 [shape = 'u8[8192]{0}', space=vmem, size = 0x2000, scoped, tag = 'input window, operand 0, single buffered']
    #allocation3 [shape = 's32[1]{0}', space=sflag, size = 0x4, scoped, tag = 'scoped memory for tpu_custom_call.1']
    #allocation4 [shape = 's32[1]{0}', space=sflag, size = 0x4, scoped, tag = 'scoped memory for tpu_custom_call.1']
    #allocation5 [shape = 'u8[8192]{0}', space=vmem, size = 0x2000, scoped, tag = 'output window, operand 0, single buffered']
    %6 = vsyncpa [#allocation3], 0
    %7 = vsyncpa [#allocation4], 0
    // Predicated region
    $region2: #{tpu_custom_call.1} parent=1 // pred_check
      _
    $region3: #{tpu_custom_call.1} parent=1 // pred_check_branch
      %9 = sbr.rel (0) target = $region5
    $region4: #{tpu_custom_call.1} parent=1 // pred_region
      %s11 = ssub.s32 256, 256
      %12 = vsyncadd [#allocation3], %s11
      %s14 = sshll.u32 [#allocation2], 4
      %s15 = int_to_ptr.vmem [resolvable:$true] %s14
      %17 = dma.hbm_to_vmem [thread:$0]  %s0, 256, %s15, [#allocation3]
    $region5: #{tpu_custom_call.1} parent=1 // pred_fallthru
      _
    // Predicated region
    $region6: #{tpu_custom_call.1} parent=1 // pred_check
      _
    $region7: #{tpu_custom_call.1} parent=1 // pred_check_branch
      %19 = sbr.rel (0) target = $region9
    $region8: #{tpu_custom_call.1} parent=1 // pred_region
      %20 = dma.done [#allocation3], 256
    $region9: #{tpu_custom_call.1} parent=1 // pred_fallthru
      _
    %v21 = vld [vmem:[#allocation2] sm:$0xff]
    %v22 = vld [vmem:[#allocation2 + $0x8] sm:$0xff]
    %v23 = vmul.f32 %v21, 0.003921569
    %v24 = vmul.f32 %v22, 0.003921569
    %25 = vst [vmem:[#allocation5] sm:$0xff] %v23
    %26 = vst [vmem:[#allocation5 + $0x8] sm:$0xff] %v24
    // Predicated region
    $region10: #{tpu_custom_call.1} parent=1 // pred_check
      _
    $region11: #{tpu_custom_call.1} parent=1 // pred_check_branch
      %28 = sbr.rel (0) target = $region13
    $region12: #{tpu_custom_call.1} parent=1 // pred_region
      %s30 = ssub.s32 256, 256
      %31 = vsyncadd [#allocation4], %s30
      %s33 = sshll.u32 [#allocation5], 4
      %s34 = int_to_ptr.vmem [resolvable:$true] %s33
      %36 = dma.vmem_to_hbm [thread:$0]  %s34, 256, %s1, [#allocation4]
    $region13: #{tpu_custom_call.1} parent=1 // pred_fallthru
      _
    // Predicated region
    $region14: #{tpu_custom_call.1} parent=1 // pred_check
      _
    $region15: #{tpu_custom_call.1} parent=1 // pred_check_branch
      %38 = sbr.rel (0) target = $region17
    $region16: #{tpu_custom_call.1} parent=1 // pred_region
      %39 = dma.done [#allocation4], 256
    $region17: #{tpu_custom_call.1} parent=1 // pred_fallthru
      _
    %40 = vsyncpa [#allocation3], 1
    %41 = vsyncpa [#allocation4], 1

</llo_original>
